<compile_context>
chip_gen: v7x
topology: tpu7x:2x2x1
jax: 0.10.0
libtpu: 0.0.40
codegen_flags: <defaults>
</compile_context>

<pallas_src>
import jax
import jax.numpy as jnp
from jax.experimental import pallas as pl
from jax.experimental.pallas import tpu as pltpu


def out_layer_kernel(x_ref, w_ref, b_ref, o_ref):
    # x_ref: (1, C, T) VMEM   w_ref: (2, C) SMEM   b_ref: (2,) SMEM
    # o_ref: (1, 2, T) VMEM
    C = x_ref.shape[1]

    # Unrolled broadcast-FMA over channels (VPU only; w/b read as scalars).
    l0 = b_ref[0]
    l1 = b_ref[1]
    for c in range(C):
        xc = x_ref[0, c:c + 1, :]          # (1, T) lane-dense row
        l0 = l0 + w_ref[0, c] * xc
        l1 = l1 + w_ref[1, c] * xc

    # 2-class softmax == sigmoid of the logit difference.
    # p1 = exp(l1) / (exp(l0) + exp(l1)) = 1 / (1 + exp(l0 - l1))
    d = (l0 - l1).astype(jnp.float32)
    p1 = 1.0 / (1.0 + jnp.exp(d))          # exact divide keeps 1e-5 accuracy
    p0 = 1.0 - p1

    o_ref[0, 0:1, :] = p0.astype(o_ref.dtype)
    o_ref[0, 1:2, :] = p1.astype(o_ref.dtype)


def out_layer(x, w, b, *, tile_s_max=8192):
    """x: (N, C, D, H, W) float32; w: (2, C); b: (2,). Returns (N, 2, D, H, W)."""
    N, C, D, H, W = x.shape
    S = D * H * W
    x_flat = x.reshape(N, C, S)

    # Largest legal lane tile: all of S (block == full dim) or the biggest
    # multiple of 128 not exceeding tile_s_max.
    if S <= tile_s_max:
        tile_s = S
    else:
        tile_s = (tile_s_max // 128) * 128
    num_tiles = pl.cdiv(S, tile_s)

    # v7x megacore: keep at least 2 parallel grid steps when possible so both
    # TensorCores (and their HBM bandwidth share) are used.
    if N * num_tiles < 2 and S > 128:
        tile_s = ((S + 1) // 2 + 127) // 128 * 128
        num_tiles = pl.cdiv(S, tile_s)

    cost = pl.CostEstimate(
        flops=2 * 2 * C * N * S + 5 * N * S,       # channel FMAs + softmax arith
        transcendentals=N * S,                      # one exp per spatial element
        bytes_accessed=4 * N * S * (C + 2),         # read x, write 2-ch output
    )

    out_flat = pl.pallas_call(
        out_layer_kernel,
        out_shape=jax.ShapeDtypeStruct((N, 2, S), x.dtype),
        grid_spec=pltpu.PrefetchScalarGridSpec(
            num_scalar_prefetch=0,
            grid=(N, num_tiles),
            in_specs=[
                pl.BlockSpec((1, C, tile_s), lambda n, s: (n, 0, s)),
                pl.BlockSpec(memory_space=pltpu.MemorySpace.SMEM),   # w (2, C)
                pl.BlockSpec(memory_space=pltpu.MemorySpace.SMEM),   # b (2,)
            ],
            out_specs=pl.BlockSpec((1, 2, tile_s), lambda n, s: (n, 0, s)),
        ),
        compiler_params=pltpu.CompilerParams(
            dimension_semantics=("parallel", "parallel")),
        cost_estimate=cost,
    )(x_flat, w, b)

    return out_flat.reshape(N, 2, D, H, W)


def out_layer_ref(x, w, b):
    # Pure-JAX reference: 1x1x1 conv (channel matmul) + softmax over channels.
    N, C, D, H, W = x.shape
    xf = x.reshape(N, C, -1)                       # (N, C, S)
    logits = jnp.einsum("oc,ncs->nos", w, xf) + b[None, :, None]
    probs = jax.nn.softmax(logits, axis=1)
    return probs.reshape(N, 2, D, H, W)


if __name__ == "__main__":
    key = jax.random.PRNGKey(0)
    kx, kw, kb = jax.random.split(key, 3)

    # Small shapes: batch=2, in_channels=4, spatial (D,H,W)=(4,8,8) -> S=256
    N, C, D, H, W = 2, 4, 4, 8, 8
    x = jax.random.normal(kx, (N, C, D, H, W), dtype=jnp.float32)

    # Deterministic Conv3d(in_channels=4, out_channels=2, kernel_size=1) params.
    # Kernel-size-1 conv weight (2, C, 1, 1, 1) collapses to a (2, C) matrix.
    w = jax.random.normal(kw, (2, C), dtype=jnp.float32) * 0.5
    b = jax.random.normal(kb, (2,), dtype=jnp.float32) * 0.1

    out = out_layer(x, w, b)
    out = jax.block_until_ready(out)

    ref = out_layer_ref(x, w, b)
    assert out.shape == (N, 2, D, H, W)
    assert jnp.allclose(out, ref, atol=1e-5, rtol=1e-5), "mismatch vs reference"

    print("KERNEL_OK")
</pallas_src>

<mosaic_0001>
module attributes {stable_mosaic.version = 11 : i64} {
  func.func @out_layer_kernel(%arg0: i32, %arg1: i32, %arg2: memref<1x4x256xf32, #tpu.memory_space<vmem>>, %arg3: memref<2x4xf32, #tpu.memory_space<smem>>, %arg4: memref<2xf32, #tpu.memory_space<smem>>, %arg5: memref<1x2x256xf32, #tpu.memory_space<vmem>>) attributes {dimension_semantics = [#tpu.dimension_semantics<parallel>, #tpu.dimension_semantics<parallel>], iteration_bounds = array<i64: 2, 1>, scalar_prefetch = 0 : i64, scratch_operands = 0 : i64, tpu.core_type = #tpu.core_type<tc>, window_params = [{transform_indices = @transform_0, window_bounds = array<i64: 1, 4, 256>}, {transform_indices = @transform_1, window_bounds = array<i64: 2, 4>}, {transform_indices = @transform_2, window_bounds = array<i64: 2>}, {transform_indices = @transform_3, window_bounds = array<i64: 1, 2, 256>}]} {
    %c0 = arith.constant 0 : index
    %0 = memref.load %arg4[%c0] : memref<2xf32, #tpu.memory_space<smem>>
    %c1 = arith.constant 1 : index
    %1 = memref.load %arg4[%c1] : memref<2xf32, #tpu.memory_space<smem>>
    %c0_0 = arith.constant 0 : index
    %c0_1 = arith.constant 0 : index
    %c0_2 = arith.constant 0 : index
    %2 = vector.load %arg2[%c0_0, %c0_1, %c0_2] : memref<1x4x256xf32, #tpu.memory_space<vmem>>, vector<1x1x256xf32>
    %3 = vector.shape_cast %2 : vector<1x1x256xf32> to vector<1x256xf32>
    %c0_3 = arith.constant 0 : index
    %c0_4 = arith.constant 0 : index
    %4 = memref.load %arg3[%c0_3, %c0_4] : memref<2x4xf32, #tpu.memory_space<smem>>
    %5 = vector.broadcast %4 : f32 to vector<1x256xf32>
    %6 = arith.mulf %5, %3 : vector<1x256xf32>
    %7 = vector.broadcast %0 : f32 to vector<1x256xf32>
    %8 = arith.addf %7, %6 : vector<1x256xf32>
    %c1_5 = arith.constant 1 : index
    %c0_6 = arith.constant 0 : index
    %9 = memref.load %arg3[%c1_5, %c0_6] : memref<2x4xf32, #tpu.memory_space<smem>>
    %10 = vector.broadcast %9 : f32 to vector<1x256xf32>
    %11 = arith.mulf %10, %3 : vector<1x256xf32>
    %12 = vector.broadcast %1 : f32 to vector<1x256xf32>
    %13 = arith.addf %12, %11 : vector<1x256xf32>
    %c0_7 = arith.constant 0 : index
    %c1_8 = arith.constant 1 : index
    %c0_9 = arith.constant 0 : index
    %14 = vector.load %arg2[%c0_7, %c1_8, %c0_9] : memref<1x4x256xf32, #tpu.memory_space<vmem>>, vector<1x1x256xf32>
    %15 = vector.shape_cast %14 : vector<1x1x256xf32> to vector<1x256xf32>
    %c0_10 = arith.constant 0 : index
    %c1_11 = arith.constant 1 : index
    %16 = memref.load %arg3[%c0_10, %c1_11] : memref<2x4xf32, #tpu.memory_space<smem>>
    %17 = vector.broadcast %16 : f32 to vector<1x256xf32>
    %18 = arith.mulf %17, %15 : vector<1x256xf32>
    %19 = arith.addf %8, %18 : vector<1x256xf32>
    %c1_12 = arith.constant 1 : index
    %c1_13 = arith.constant 1 : index
    %20 = memref.load %arg3[%c1_12, %c1_13] : memref<2x4xf32, #tpu.memory_space<smem>>
    %21 = vector.broadcast %20 : f32 to vector<1x256xf32>
    %22 = arith.mulf %21, %15 : vector<1x256xf32>
    %23 = arith.addf %13, %22 : vector<1x256xf32>
    %c0_14 = arith.constant 0 : index
    %c2 = arith.constant 2 : index
    %c0_15 = arith.constant 0 : index
    %24 = vector.load %arg2[%c0_14, %c2, %c0_15] : memref<1x4x256xf32, #tpu.memory_space<vmem>>, vector<1x1x256xf32>
    %25 = vector.shape_cast %24 : vector<1x1x256xf32> to vector<1x256xf32>
    %c0_16 = arith.constant 0 : index
    %c2_17 = arith.constant 2 : index
    %26 = memref.load %arg3[%c0_16, %c2_17] : memref<2x4xf32, #tpu.memory_space<smem>>
    %27 = vector.broadcast %26 : f32 to vector<1x256xf32>
    %28 = arith.mulf %27, %25 : vector<1x256xf32>
    %29 = arith.addf %19, %28 : vector<1x256xf32>
    %c1_18 = arith.constant 1 : index
    %c2_19 = arith.constant 2 : index
    %30 = memref.load %arg3[%c1_18, %c2_19] : memref<2x4xf32, #tpu.memory_space<smem>>
    %31 = vector.broadcast %30 : f32 to vector<1x256xf32>
    %32 = arith.mulf %31, %25 : vector<1x256xf32>
    %33 = arith.addf %23, %32 : vector<1x256xf32>
    %c0_20 = arith.constant 0 : index
    %c3 = arith.constant 3 : index
    %c0_21 = arith.constant 0 : index
    %34 = vector.load %arg2[%c0_20, %c3, %c0_21] : memref<1x4x256xf32, #tpu.memory_space<vmem>>, vector<1x1x256xf32>
    %35 = vector.shape_cast %34 : vector<1x1x256xf32> to vector<1x256xf32>
    %c0_22 = arith.constant 0 : index
    %c3_23 = arith.constant 3 : index
    %36 = memref.load %arg3[%c0_22, %c3_23] : memref<2x4xf32, #tpu.memory_space<smem>>
    %37 = vector.broadcast %36 : f32 to vector<1x256xf32>
    %38 = arith.mulf %37, %35 : vector<1x256xf32>
    %39 = arith.addf %29, %38 : vector<1x256xf32>
    %c1_24 = arith.constant 1 : index
    %c3_25 = arith.constant 3 : index
    %40 = memref.load %arg3[%c1_24, %c3_25] : memref<2x4xf32, #tpu.memory_space<smem>>
    %41 = vector.broadcast %40 : f32 to vector<1x256xf32>
    %42 = arith.mulf %41, %35 : vector<1x256xf32>
    %43 = arith.addf %33, %42 : vector<1x256xf32>
    %44 = arith.subf %39, %43 : vector<1x256xf32>
    %45 = math.exp %44 : vector<1x256xf32>
    %cst = arith.constant 1.000000e+00 : f32
    %46 = vector.broadcast %cst : f32 to vector<1x256xf32>
    %47 = arith.addf %46, %45 : vector<1x256xf32>
    %cst_26 = arith.constant 1.000000e+00 : f32
    %48 = vector.broadcast %cst_26 : f32 to vector<1x256xf32>
    %49 = arith.divf %48, %47 : vector<1x256xf32>
    %cst_27 = arith.constant 1.000000e+00 : f32
    %50 = vector.broadcast %cst_27 : f32 to vector<1x256xf32>
    %51 = arith.subf %50, %49 : vector<1x256xf32>
    %c0_28 = arith.constant 0 : index
    %c0_29 = arith.constant 0 : index
    %c0_30 = arith.constant 0 : index
    %52 = vector.load %arg5[%c0_28, %c0_29, %c0_30] : memref<1x2x256xf32, #tpu.memory_space<vmem>>, vector<1x1x256xf32>
    %53 = vector.shape_cast %52 : vector<1x1x256xf32> to vector<1x256xf32>
    %54 = vector.shape_cast %51 : vector<1x256xf32> to vector<1x1x256xf32>
    tpu.vector_store %arg5[%c0_28, %c0_29, %c0_30], %54 {strides = array<i32>} : memref<1x2x256xf32, #tpu.memory_space<vmem>>, vector<1x1x256xf32>,
    %c0_31 = arith.constant 0 : index
    %c1_32 = arith.constant 1 : index
    %c0_33 = arith.constant 0 : index
    %55 = vector.load %arg5[%c0_31, %c1_32, %c0_33] : memref<1x2x256xf32, #tpu.memory_space<vmem>>, vector<1x1x256xf32>
    %56 = vector.shape_cast %55 : vector<1x1x256xf32> to vector<1x256xf32>
    %57 = vector.shape_cast %49 : vector<1x256xf32> to vector<1x1x256xf32>
    tpu.vector_store %arg5[%c0_31, %c1_32, %c0_33], %57 {strides = array<i32>} : memref<1x2x256xf32, #tpu.memory_space<vmem>>, vector<1x1x256xf32>,
    return
  }
  func.func @transform_0(%arg0: i32, %arg1: i32) -> (i32, i32, i32) {
    %c0_i32 = arith.constant 0 : i32
    %c0_i32_0 = arith.constant 0 : i32
    return %arg0, %c0_i32, %arg1 : i32, i32, i32
  }
  func.func @transform_1(%arg0: i32, %arg1: i32) -> (i32, i32) {
    %c0_i32 = arith.constant 0 : i32
    %c0_i32_0 = arith.constant 0 : i32
    %c0_i32_1 = arith.constant 0 : i32
    return %c0_i32, %c0_i32_0 : i32, i32
  }
  func.func @transform_2(%arg0: i32, %arg1: i32) -> i32 {
    %c0_i32 = arith.constant 0 : i32
    %c0_i32_0 = arith.constant 0 : i32
    return %c0_i32 : i32
  }
  func.func @transform_3(%arg0: i32, %arg1: i32) -> (i32, i32, i32) {
    %c0_i32 = arith.constant 0 : i32
    %c0_i32_0 = arith.constant 0 : i32
    return %arg0, %c0_i32, %arg1 : i32, i32, i32
  }
}

</mosaic_0001>

<llo_original>
// kernel: tpu_custom_call.1
$region0: #{tpu_custom_call.1}
  #allocation0 [shape = 'u32[]', space=smem, size = 0x4, offset = 0x4, fixed_abs, tag = 'smem constant byte address 0x4 - core index']
  #allocation1 [shape = 'u32[144,128]{1,0:T(1,128)}', space=vmem, size = 0x12000, scoped, tag = 'internal scratch']
  %s0 = inlined_call_operand.hbm [shape: f32[2,4,256], index: 0, kind: input, shape index: {}]
  %s1 = inlined_call_operand.vmem [shape: f32[2,4], index: 1, kind: input, shape index: {}]
  %s2 = inlined_call_operand.vmem [shape: f32[2], index: 2, kind: input, shape index: {}]
  %s3 = inlined_call_operand.hbm [shape: f32[2,2,256], index: 3, kind: output, shape index: {}]
  %s4 = sld [smem:[#allocation0]]
  $region57: #{tpu_custom_call.1} parent=0
    _
  %s6 = ssub.s32 1, %s4
  %s7 = scalar_select 0, %s6, %s4
  $region1: #{tpu_custom_call.1} parent=0
    #allocation2 [shape = 'u8[8192]{0}', space=vmem, size = 0x2000, scoped, tag = 'input window, operand 0']
    #allocation3 [shape = 's32[2]{0}', space=sflag, size = 0x8, scoped, tag = 'scoped memory for tpu_custom_call.1']
    #allocation4 [shape = 's32[2]{0}', space=sflag, size = 0x8, scoped, tag = 'scoped memory for tpu_custom_call.1']
    #allocation5 [shape = 's32[2]{0}', space=sflag, size = 0x8, scoped, tag = 'scoped memory for tpu_custom_call.1']
    #allocation6 [shape = 'u8[1024]{0}', space=smem, size = 0x400, scoped, tag = 'input window, operand 1, single buffered']
    #allocation7 [shape = 'u8[512]{0}', space=smem, size = 0x200, scoped, tag = 'input window, operand 2, single buffered']
    #allocation8 [shape = 's32[1]{0}', space=sflag, size = 0x4, scoped, tag = 'scoped memory for tpu_custom_call.1']
    #allocation9 [shape = 'u8[4096]{0}', space=vmem, size = 0x1000, scoped, tag = 'output window, operand 0']
    %8 = vsyncpa [#allocation3], 0
    %s9 = scalar_lea.sflag [#allocation3], 1
    %10 = vsyncpa %s9, 0
    %11 = vsyncpa [#allocation5], 0
    %12 = vsyncpa [#allocation8], 0
    %13 = vsyncpa [#allocation4], 0
    %s14 = scalar_lea.sflag [#allocation4], 1
    %15 = vsyncpa %s14, 0
    loop: start=0, step=1, limit=4
    $region2: #{tpu_custom_call.1} parent=1 // loop_pre_header
      _
    $region3: #{tpu_custom_call.1} parent=1 // loop_header
      %s17 = sphi 0, %s21
      %p18 = scmp.ge.s32.totalorder %s17, 4
      %s24 = sphi 0, %s36
      %s25 = sphi 0, %s32
      %s26 = sphi 0, %s24
      %s27 = sphi 0, %s25
      %s28 = sphi 0, %s26
      %s29 = sphi 0, %s27
      %s41 = sphi 0, %s43
      %s44 = sphi 0, %s41
      %s45 = sphi 0, %s44
      %s61 = sphi 0, %s45
      %s65 = sphi 0, %s65
      %s67 = sphi 0, %s65
      %s68 = sphi 0, %s67
      %s82 = sphi 0, %s68
      %s86 = sphi 0, %s86
      %s88 = sphi 0, %s86
      %s89 = sphi 0, %s88
      %s103 = sphi 0, %s89
      %s111 = sphi 0, %s113
      %s114 = sphi 0, %s111
      %s115 = sphi 0, %s114
      %s131 = sphi 0, %s115
    $region4: #{tpu_custom_call.1} parent=1 // loop_header_branch
      %20 = sbr.rel (%p18) target = $region8
    $region5: #{tpu_custom_call.1} parent=1 // loop_body
      %s22 = ssub.s32 %s17, 1
      %s23 = ssub.s32 %s17, 2
      %s30 = sadd.s32 1, %s25
      %p31 = scmp.ge.s32.totalorder %s30, 1
      %s32 = scalar_select %p31, 0, %s30
      %s33 = sadd.s32 1, %s24
      %s34 = scalar_select %p31, %s33, %s24
      %p35 = scmp.ge.s32.totalorder %s34, 2
      %s36 = scalar_select %p35, 0, %s34
      %s37 = ssub.s32 %s24, %s36
      %s38 = ssub.s32 %s25, %s32
      %s39 = sor.u32 %s37, %s38
      %p40 = scmp.eq.s32.totalorder %s39, 0
      %s42 = sadd.s32 %s41, 1
      %s43 = scalar_select %p40, %s41, %s42
      %p46 = pneg %p40
      %p47 = scmp.eq.s32.totalorder %s17, 1
      %p48 = por %p46, %p47
      %p49 = scmp.ne.s32.totalorder %s41, %s44
      %p50 = scmp.eq.s32.totalorder %s17, 0
      %p51 = por %p49, %p50
      %p52 = scmp.ne.s32.totalorder %s41, %s44
      %p53 = scmp.eq.s32.totalorder %s22, 1
      %p54 = por %p52, %p53
      %p55 = scmp.ne.s32.totalorder %s44, %s45
      %p56 = scmp.eq.s32.totalorder %s22, 0
      %p57 = por %p55, %p56
      %p58 = scmp.ne.s32.totalorder %s44, %s45
      %p59 = scmp.eq.s32.totalorder %s23, 1
      %p60 = por %p58, %p59
      %p62 = scmp.ne.s32.totalorder %s45, %s61
      %p63 = scmp.eq.s32.totalorder %s23, 0
      %p64 = por %p62, %p63
      %s66 = sadd.s32 %s65, 1
      %p69 = scmp.eq.s32.totalorder %s17, 1
      %p70 = scmp.ne.s32.totalorder %s65, %s67
      %p71 = scmp.eq.s32.totalorder %s17, 0
      %p72 = por %p70, %p71
      %p73 = scmp.ne.s32.totalorder %s65, %s67
      %p74 = scmp.eq.s32.totalorder %s22, 1
      %p75 = por %p73, %p74
      %p76 = scmp.ne.s32.totalorder %s67, %s68
      %p77 = scmp.eq.s32.totalorder %s22, 0
      %p78 = por %p76, %p77
      %p79 = scmp.ne.s32.totalorder %s67, %s68
      %p80 = scmp.eq.s32.totalorder %s23, 1
      %p81 = por %p79, %p80
      %p83 = scmp.ne.s32.totalorder %s68, %s82
      %p84 = scmp.eq.s32.totalorder %s23, 0
      %p85 = por %p83, %p84
      %s87 = sadd.s32 %s86, 1
      %p90 = scmp.eq.s32.totalorder %s17, 1
      %p91 = scmp.ne.s32.totalorder %s86, %s88
      %p92 = scmp.eq.s32.totalorder %s17, 0
      %p93 = por %p91, %p92
      %p94 = scmp.ne.s32.totalorder %s86, %s88
      %p95 = scmp.eq.s32.totalorder %s22, 1
      %p96 = por %p94, %p95
      %p97 = scmp.ne.s32.totalorder %s88, %s89
      %p98 = scmp.eq.s32.totalorder %s22, 0
      %p99 = por %p97, %p98
      %p100 = scmp.ne.s32.totalorder %s88, %s89
      %p101 = scmp.eq.s32.totalorder %s23, 1
      %p102 = por %p100, %p101
      %p104 = scmp.ne.s32.totalorder %s89, %s103
      %p105 = scmp.eq.s32.totalorder %s23, 0
      %p106 = por %p104, %p105
      %s107 = ssub.s32 %s24, %s36
      %s108 = ssub.s32 %s25, %s32
      %s109 = sor.u32 %s107, %s108
      %p110 = scmp.eq.s32.totalorder %s109, 0
      %s112 = sadd.s32 %s111, 1
      %s113 = scalar_select %p110, %s111, %s112
      %p116 = pneg %p110
      %p117 = scmp.eq.s32.totalorder %s17, 1
      %p118 = por %p116, %p117
      %p119 = scmp.ne.s32.totalorder %s111, %s114
      %p120 = scmp.eq.s32.totalorder %s17, 0
      %p121 = por %p119, %p120
      %p122 = scmp.ne.s32.totalorder %s111, %s114
      %p123 = scmp.eq.s32.totalorder %s22, 1
      %p124 = por %p122, %p123
      %p125 = scmp.ne.s32.totalorder %s114, %s115
      %p126 = scmp.eq.s32.totalorder %s22, 0
      %p127 = por %p125, %p126
      %p128 = scmp.ne.s32.totalorder %s114, %s115
      %p129 = scmp.eq.s32.totalorder %s23, 1
      %p130 = por %p128, %p129
      %p132 = scmp.ne.s32.totalorder %s115, %s131
      %p133 = scmp.eq.s32.totalorder %s23, 0
      %p134 = por %p132, %p133
      %p135 = scmp.le.s32.totalorder 1, %s17
      %p136 = scmp.lt.s32.totalorder %s17, 3
      %p137 = pnand %p135, %p136
      %p138 = pneg %p137
      // Predicated region
      $region9: #{tpu_custom_call.1} parent=5 // pred_check
        _
      $region10: #{tpu_custom_call.1} parent=5 // pred_check_branch
        %140 = sbr.rel (%p137) target = $region12
      $region11: #{tpu_custom_call.1} parent=5 // pred_region
        %s141 = ssub.s32 %s17, 1
        // Predicated region
        $region13: #{tpu_custom_call.1} parent=11 // pred_check
          %p142 = pneg %p78
        $region14: #{tpu_custom_call.1} parent=11 // pred_check_branch
          %144 = sbr.rel (%p142) target = $region16
        $region15: #{tpu_custom_call.1} parent=11 // pred_region
          %s146 = ssub.s32 32, 32
          %147 = vsyncadd [#allocation5], %s146
          %s149 = sshll.u32 %s1, 4
          %s150 = int_to_ptr.vmem [resolvable:$true] %s149
          %152 = dma.vmem_to_smem %s150, 32, [#allocation6], [#allocation5]
        $region16: #{tpu_custom_call.1} parent=11 // pred_fallthru
          _
        // Predicated region
        $region17: #{tpu_custom_call.1} parent=11 // pred_check
          %p153 = pneg %p99
        $region18: #{tpu_custom_call.1} parent=11 // pred_check_branch
          %155 = sbr.rel (%p153) target = $region20
        $region19: #{tpu_custom_call.1} parent=11 // pred_region
          %s157 = ssub.s32 16, 16
          %158 = vsyncadd [#allocation8], %s157
          %s160 = sshll.u32 %s2, 4
          %s161 = int_to_ptr.vmem [resolvable:$true] %s160
          %163 = dma.vmem_to_smem %s161, 16, [#allocation7], [#allocation8]
        $region20: #{tpu_custom_call.1} parent=11 // pred_fallthru
          _
      $region12: #{tpu_custom_call.1} parent=5 // pred_fallthru
        _
      %p164 = scmp.lt.s32.totalorder %s17, 2
      // Predicated region
      $region21: #{tpu_custom_call.1} parent=5 // pred_check
        %p165 = pneg %p164
      $region22: #{tpu_custom_call.1} parent=5 // pred_check_branch
        %167 = sbr.rel (%p165) target = $region24
      $region23: #{tpu_custom_call.1} parent=5 // pred_region
        // Predicated region
        $region25: #{tpu_custom_call.1} parent=23 // pred_check
          %p168 = pneg %p51
        $region26: #{tpu_custom_call.1} parent=23 // pred_check_branch
          %170 = sbr.rel (%p168) target = $region28
        $region27: #{tpu_custom_call.1} parent=23 // pred_region
          %s171 = sand.u32 %s41, 1
          %s172 = scalar_lea.sflag [#allocation3], %s171
          %s173 = sand.u32 %s41, 1
          %s174 = smul.addr %s173, 8
          %s175 = scalar_lea.vmem [#allocation2], %s174
          %s176 = smul.u32 2, %s25
          %s178 = ssub.s32 128, 128
          %179 = vsyncadd %s172, %s178
          %s180 = smul.addr %s24, 2
          %s181 = sadd.s32 %s176, %s180
          %s182 = smul.addr %s181, 64
          %s183 = scalar_lea.hbm %s0, %s182
          %s185 = sshll.u32 %s175, 4
          %s186 = int_to_ptr.vmem [resolvable:$true] %s185
          %188 = dma.hbm_to_vmem [thread:$0]  %s183, 128, %s186, %s172
        $region28: #{tpu_custom_call.1} parent=23 // pred_fallthru
          _
      $region24: #{tpu_custom_call.1} parent=5 // pred_fallthru
        _
      %p189 = scmp.le.s32.totalorder 1, %s17
      %p190 = scmp.lt.s32.totalorder %s17, 3
      %p191 = pnand %p189, %p190
      %p192 = pneg %p191
      // Predicated region
      $region29: #{tpu_custom_call.1} parent=5 // pred_check
        _
      $region30: #{tpu_custom_call.1} parent=5 // pred_check_branch
        %194 = sbr.rel (%p191) target = $region32
      $region31: #{tpu_custom_call.1} parent=5 // pred_region
        %s195 = ssub.s32 %s17, 1
        %s196 = sand.u32 %s44, 1
        %s197 = scalar_lea.sflag [#allocation3], %s196
        %s198 = sand.u32 %s44, 1
        %s199 = smul.addr %s198, 8
        %s200 = scalar_lea.vmem [#allocation2], %s199
        // Predicated region
        $region33: #{tpu_custom_call.1} parent=31 // pred_check
          %p201 = pneg %p57
        $region34: #{tpu_custom_call.1} parent=31 // pred_check_branch
          %203 = sbr.rel (%p201) target = $region36
        $region35: #{tpu_custom_call.1} parent=31 // pred_region
          %204 = dma.done %s197, 128
        $region36: #{tpu_custom_call.1} parent=31 // pred_fallthru
          _
        // Predicated region
        $region37: #{tpu_custom_call.1} parent=31 // pred_check
          %p205 = pneg %p78
        $region38: #{tpu_custom_call.1} parent=31 // pred_check_branch
          %207 = sbr.rel (%p205) target = $region40
        $region39: #{tpu_custom_call.1} parent=31 // pred_region
          %208 = dma.done [#allocation5], 32
        $region40: #{tpu_custom_call.1} parent=31 // pred_fallthru
          _
        // Predicated region
        $region41: #{tpu_custom_call.1} parent=31 // pred_check
          %p209 = pneg %p99
        $region42: #{tpu_custom_call.1} parent=31 // pred_check_branch
          %211 = sbr.rel (%p209) target = $region44
        $region43: #{tpu_custom_call.1} parent=31 // pred_region
          %212 = dma.done [#allocation8], 16
        $region44: #{tpu_custom_call.1} parent=31 // pred_fallthru
          _
        %213 = sfence
        %s214 = sand.u32 %s44, 1
        %s215 = scalar_lea.sflag [#allocation3], %s214
        %s216 = sand.u32 %s44, 1
        %s217 = smul.addr %s216, 8
        %s218 = scalar_lea.vmem [#allocation2], %s217
        %p219 = pneg %p57
        %p220 = pneg %p54
        %p221 = pneg %p78
        %p222 = pneg %p75
        %p223 = pneg %p99
        %p224 = pneg %p96
        %p225 = pneg %p127
        %p226 = pneg %p124
        %s227 = sand.u32 %s114, 1
        %s228 = scalar_lea.sflag [#allocation4], %s227
        %s229 = sand.u32 %s114, 1
        %s230 = smul.addr %s229, 4
        %s231 = scalar_lea.vmem [#allocation9], %s230
        %s232 = smul.u32 2, %s27
        %s233 = smul.u32 2, %s27
        %s234 = sld [smem:[#allocation7]]
        %s235 = sld [smem:[#allocation7 + $0x1]]
        %v236 = vld [vmem:[%s200] ss:$4 sm:$0x3]
        %s237 = sld [smem:[#allocation6]]
        %v238 = vstv %s237
        %v239 = vmul.f32 %v238, %v236
        %v240 = vstv %s234
        %v241 = vadd.f32 %v240, %v239
        %s242 = sld [smem:[#allocation6 + $0x80]]
        %v243 = vstv %s242
        %v244 = vmul.f32 %v243, %v236
        %v245 = vstv %s235
        %v246 = vadd.f32 %v245, %v244
        %s247 = scalar_lea.vmem %s200, 1 [#allocation2]
        %v248 = vld [vmem:[%s247] ss:$4 sm:$0x3]
        %s249 = sld [smem:[#allocation6 + $0x1]]
        %v250 = vstv %s249
        %v251 = vmul.f32 %v250, %v248
        %v252 = vadd.f32 %v241, %v251
        %s253 = sld [smem:[#allocation6 + $0x81]]
        %v254 = vstv %s253
        %v255 = vmul.f32 %v254, %v248
        %v256 = vadd.f32 %v246, %v255
        %s257 = scalar_lea.vmem %s200, 2 [#allocation2]
        %v258 = vld [vmem:[%s257] ss:$4 sm:$0x3]
        %s259 = sld [smem:[#allocation6 + $0x2]]
        %v260 = vstv %s259
        %v261 = vmul.f32 %v260, %v258
        %v262 = vadd.f32 %v252, %v261
        %s263 = sld [smem:[#allocation6 + $0x82]]
        %v264 = vstv %s263
        %v265 = vmul.f32 %v264, %v258
        %v266 = vadd.f32 %v256, %v265
        %s267 = scalar_lea.vmem %s200, 3 [#allocation2]
        %v268 = vld [vmem:[%s267] ss:$4 sm:$0x3]
        %s269 = sld [smem:[#allocation6 + $0x3]]
        %v270 = vstv %s269
        %v271 = vmul.f32 %v270, %v268
        %v272 = vadd.f32 %v262, %v271
        %s273 = sld [smem:[#allocation6 + $0x83]]
        %v274 = vstv %s273
        %v275 = vmul.f32 %v274, %v268
        %v276 = vadd.f32 %v266, %v275
        %v277 = vsub.f32 %v272, %v276
        %v278 = vmul.f32 %v277, 1.442695
        %v279 = vpow.pop %v278
        %v280 = vadd.f32 %v279, 1.0
        %v281 = vrcp.pop %v280
        %v282 = vmul.f32 1.0, %v281
        %v283 = vsub.f32 1.0, %v282
        %v284 = vlaneseq
        %vm285 = vcmp.ge.s32.totalorder %v284, 0
        %vm286 = vcmp.lt.s32.totalorder %v284, 256
        %vm287 = vmand %vm285, %vm286
        %288 = vst.msk [vmem:[%s231] ss:$2 sm:$0x3] %vm287, %v283
        %s289 = scalar_lea.vmem %s231, 1 [#allocation9]
        %290 = vst.msk [vmem:[%s289] ss:$2 sm:$0x3] %vm287, %v282
        %s291 = sand.u32 %s114, 1
        %s292 = scalar_lea.sflag [#allocation4], %s291
        %s293 = sand.u32 %s114, 1
        %s294 = smul.addr %s293, 4
        %s295 = scalar_lea.vmem [#allocation9], %s294
        // Predicated region
        $region45: #{tpu_custom_call.1} parent=31 // pred_check
          %p296 = pneg %p124
        $region46: #{tpu_custom_call.1} parent=31 // pred_check_branch
          %298 = sbr.rel (%p296) target = $region48
        $region47: #{tpu_custom_call.1} parent=31 // pred_region
          %s299 = smul.u32 2, %s27
          %s301 = ssub.s32 64, 64
          %302 = vsyncadd %s292, %s301
          %s303 = smul.addr %s26, 2
          %s304 = sadd.s32 %s299, %s303
          %s305 = smul.addr %s304, 32
          %s306 = scalar_lea.hbm %s3, %s305
          %s308 = sshll.u32 %s295, 4
          %s309 = int_to_ptr.vmem [resolvable:$true] %s308
          %311 = dma.vmem_to_hbm [thread:$0]  %s309, 64, %s306, %s292
        $region48: #{tpu_custom_call.1} parent=31 // pred_fallthru
          _
      $region32: #{tpu_custom_call.1} parent=5 // pred_fallthru
        _
      %p312 = scmp.le.s32.totalorder 2, %s17
      // Predicated region
      $region49: #{tpu_custom_call.1} parent=5 // pred_check
        %p313 = pneg %p312
      $region50: #{tpu_custom_call.1} parent=5 // pred_check_branch
        %315 = sbr.rel (%p313) target = $region52
      $region51: #{tpu_custom_call.1} parent=5 // pred_region
        %s316 = ssub.s32 %s17, 2
        // Predicated region
        $region53: #{tpu_custom_call.1} parent=51 // pred_check
          %p317 = pneg %p130
        $region54: #{tpu_custom_call.1} parent=51 // pred_check_branch
          %319 = sbr.rel (%p317) target = $region56
        $region55: #{tpu_custom_call.1} parent=51 // pred_region
          %s320 = sand.u32 %s115, 1
          %s321 = scalar_lea.sflag [#allocation4], %s320
          %s322 = sand.u32 %s115, 1
          %s323 = smul.addr %s322, 4
          %s324 = scalar_lea.vmem [#allocation9], %s323
          %325 = dma.done %s321, 64
        $region56: #{tpu_custom_call.1} parent=51 // pred_fallthru
          _
      $region52: #{tpu_custom_call.1} parent=5 // pred_fallthru
        _
    $region6: #{tpu_custom_call.1} parent=1 // loop_footer
      %s21 = sadd.s32 1, %s17
    $region7: #{tpu_custom_call.1} parent=1 // loop_footer_branch
      %16 = sbr.rel target = $region3
    $region8: #{tpu_custom_call.1} parent=1 // loop_exit
      _
    %326 = vsyncpa [#allocation3], 1
    %s327 = scalar_lea.sflag [#allocation3], 1
    %328 = vsyncpa %s327, 1
    %329 = vsyncpa [#allocation4], 1
    %s330 = scalar_lea.sflag [#allocation4], 1
    %331 = vsyncpa %s330, 1
    %332 = vsyncpa [#allocation5], 1
    %s333 = scalar_lea.sflag [#allocation5], 1
    %334 = vsyncpa %s333, 1
    %335 = vsyncpa [#allocation8], 1

</llo_original>
